<compile_context>
chip_gen: v6e
topology: v6e:2x2x1
jax: 0.10.0
libtpu: 0.0.40
codegen_flags: <defaults>
</compile_context>

<pallas_src>
import functools

import jax
import jax.numpy as jnp
from jax.experimental import pallas as pl
from jax.experimental.pallas import tpu as pltpu


def _focal_factor(one_minus_pt, gamma):
    """(1 - pt) ** gamma with an integer-gamma fast path (no exp/log)."""
    g = float(gamma)
    if g == 0.0:
        return jnp.ones_like(one_minus_pt)
    if g.is_integer() and 0.0 < g <= 8.0:
        r = one_minus_pt
        for _ in range(int(g) - 1):
            r = r * one_minus_pt
        return r
    return one_minus_pt ** g


def _focal_loss_kernel(x_ref, t_ref, a_ref, out_ref, *, gamma):
    j = pl.program_id(1)

    # Output block is resident across the HW-tile (reduction) axis -> zero once.
    @pl.when(j == 0)
    def _():
        out_ref[...] = jnp.zeros_like(out_ref)

    x = x_ref[...].astype(jnp.float32)        # (1, C, THW)  logits
    t = t_ref[...]                            # (1, 1, THW)  int32 targets (-1 = pad)
    a = a_ref[...]                            # (1, C, 1)    per-class alpha

    # log_softmax over the class (sublane) axis, numerically stable.
    m = jnp.max(x, axis=1, keepdims=True)                      # (1, 1, THW)
    z = x - m
    lse = jnp.log(jnp.sum(jnp.exp(z), axis=1, keepdims=True))  # (1, 1, THW)
    logp = z - lse                                             # (1, C, THW)

    # Gather log p / alpha at the target class via one-hot masking over C.
    cls = jax.lax.broadcasted_iota(jnp.int32, x.shape, 1)      # (1, C, THW)
    onehot = cls == t                                          # padded rows: all False

    logpt = jnp.sum(jnp.where(onehot, logp, 0.0), axis=1, keepdims=True)  # (1,1,THW)
    pt = jnp.exp(logpt)
    at = jnp.sum(jnp.where(onehot, a, 0.0), axis=1, keepdims=True)        # 0 on pad

    focal = _focal_factor(1.0 - pt, gamma)
    # Padded positions: logpt == 0 and at == 0  ->  loss contribution == 0.
    out_ref[...] += -(focal * (logpt * at))


def _pick_tile_hw(hw, c, itemsize, max_tile=8192, vmem_budget_bytes=4 * 1024 * 1024):
    """Largest multiple of 128 whose double-buffered (C, tile) block fits the budget."""
    t = (vmem_budget_bytes // (2 * c * itemsize)) // 128 * 128
    t = max(128, min(max_tile, t))
    hw_rounded = ((hw + 127) // 128) * 128
    return min(t, max(128, hw_rounded))


def focal_loss(logits, target, alpha=None, gamma=0.0, size_average=True, tile_hw=None):
    """JAX/Pallas equivalent of FocalLoss.forward.

    logits : (N, C, H, W) / (N, C, L) float logits, or (M, C)
    target : integer class indices, (N, H, W) / (N, L), or (M,)
    alpha  : None, scalar (-> [1-a, a], requires C == 2) or length-C list/array
    """
    x = jnp.asarray(logits)
    if x.ndim > 2:
        N, C = x.shape[0], x.shape[1]
        x = x.reshape(N, C, -1)                               # (N, C, HW) -- no transpose
        t = jnp.asarray(target).reshape(N, 1, -1).astype(jnp.int32)
    else:
        # (M, C) rows of samples -> put the samples on the lane axis.
        C = x.shape[1]
        N = 1
        x = jnp.transpose(x, (1, 0))[None]                    # (1, C, M)
        t = jnp.asarray(target).reshape(1, 1, -1).astype(jnp.int32)
    HW = x.shape[2]
    M = N * HW                                                # total sample count

    # alpha handling mirrors the PyTorch module constructor.
    if alpha is None:
        a = jnp.ones((1, C, 1), jnp.float32)                  # multiplying by 1 == no alpha
    elif isinstance(alpha, (float, int)) and not isinstance(alpha, bool):
        a = jnp.asarray([1.0 - alpha, alpha], jnp.float32).reshape(1, 2, 1)
    else:
        a = jnp.asarray(alpha, jnp.float32).reshape(1, C, 1)

    itemsize = jnp.dtype(x.dtype).itemsize
    if tile_hw is None:
        tile_hw = _pick_tile_hw(HW, C, itemsize)
    tile_hw = max(128, (int(tile_hw) // 128) * 128)

    hw_pad = ((HW + tile_hw - 1) // tile_hw) * tile_hw
    if hw_pad != HW:
        x = jnp.pad(x, ((0, 0), (0, 0), (0, hw_pad - HW)))
        # Pad target with -1 so padded positions match no class -> zero loss.
        t = jnp.pad(t, ((0, 0), (0, 0), (0, hw_pad - HW)), constant_values=-1)
    T = hw_pad // tile_hw

    kernel = functools.partial(_focal_loss_kernel, gamma=float(gamma))

    partial_sums = pl.pallas_call(
        kernel,
        out_shape=jax.ShapeDtypeStruct((N, 1, tile_hw), jnp.float32),
        grid_spec=pltpu.PrefetchScalarGridSpec(
            num_scalar_prefetch=0,
            grid=(N, T),
            in_specs=[
                pl.BlockSpec((1, C, tile_hw), lambda n, j: (n, 0, j)),  # logits tile
                pl.BlockSpec((1, 1, tile_hw), lambda n, j: (n, 0, j)),  # target tile
                pl.BlockSpec((1, C, 1), lambda n, j: (0, 0, 0)),        # alpha (resident)
            ],
            # Lane-dense per-batch-row accumulator, resident across the j axis.
            out_specs=pl.BlockSpec((1, 1, tile_hw), lambda n, j: (n, 0, 0)),
        ),
        compiler_params=pltpu.CompilerParams(
            dimension_semantics=("parallel", "arbitrary"),
            vmem_limit_bytes=32 * 1024 * 1024,
        ),
    )(x, t, a)

    total = jnp.sum(partial_sums)          # tiny (N * tile_hw) reduction in XLA
    if size_average:
        return total / jnp.float32(M)
    return total


def _reference_focal_loss(logits, target, alpha, gamma, size_average):
    x = jnp.asarray(logits)
    if x.ndim > 2:
        N, C = x.shape[0], x.shape[1]
        x = jnp.transpose(x.reshape(N, C, -1), (0, 2, 1)).reshape(-1, C)
    t = jnp.asarray(target).reshape(-1)
    logp = jax.nn.log_softmax(x.astype(jnp.float32), axis=1)
    logpt = jnp.take_along_axis(logp, t[:, None], axis=1)[:, 0]
    pt = jnp.exp(logpt)
    if alpha is not None:
        if isinstance(alpha, (float, int)) and not isinstance(alpha, bool):
            a = jnp.asarray([1.0 - alpha, alpha], jnp.float32)
        else:
            a = jnp.asarray(alpha, jnp.float32)
        logpt = logpt * a[t]
    loss = -1.0 * (1.0 - pt) ** gamma * logpt
    return loss.mean() if size_average else loss.sum()


if __name__ == "__main__":
    key = jax.random.PRNGKey(0)
    k1, k2, k3, k4 = jax.random.split(key, 4)

    # Case 1: NCHW logits, integer gamma (fast path), list alpha, mean.
    N, C, H, W = 2, 4, 16, 16
    logits = jax.random.normal(k1, (N, C, H, W), jnp.float32)
    target = jax.random.randint(k2, (N, H, W), 0, C, jnp.int32)
    alpha = [0.1, 0.2, 0.3, 0.4]
    out = jax.block_until_ready(
        focal_loss(logits, target, alpha, gamma=2.0, size_average=True))
    ref = _reference_focal_loss(logits, target, alpha, 2.0, True)
    assert jnp.allclose(out, ref, rtol=1e-5, atol=1e-6), (out, ref)

    # Case 2: same logits, gamma=0, no alpha, sum reduction.
    out = jax.block_until_ready(
        focal_loss(logits, target, None, gamma=0.0, size_average=False))
    ref = _reference_focal_loss(logits, target, None, 0.0, False)
    assert jnp.allclose(out, ref, rtol=1e-5, atol=1e-5), (out, ref)

    # Case 3: 2-D logits with a ragged sample count (exercises lane padding)
    # and a non-integer gamma (pow path).
    M0, C2 = 37, 5
    logits2 = jax.random.normal(k3, (M0, C2), jnp.float32)
    target2 = jax.random.randint(k4, (M0,), 0, C2, jnp.int32)
    out = jax.block_until_ready(
        focal_loss(logits2, target2, None, gamma=1.5, size_average=True))
    ref = _reference_focal_loss(logits2, target2, None, 1.5, True)
    assert jnp.allclose(out, ref, rtol=1e-5, atol=1e-6), (out, ref)

    print("KERNEL_OK")
</pallas_src>

<mosaic_0001>
module attributes {stable_mosaic.version = 11 : i64} {
  func.func @_focal_loss_kernel(%arg0: i32, %arg1: i32, %arg2: memref<1x4x256xf32, #tpu.memory_space<vmem>>, %arg3: memref<1x1x256xi32, #tpu.memory_space<vmem>>, %arg4: memref<1x4x1xf32, #tpu.memory_space<vmem>>, %arg5: memref<1x1x256xf32, #tpu.memory_space<vmem>>) attributes {dimension_semantics = [#tpu.dimension_semantics<parallel>, #tpu.dimension_semantics<arbitrary>], iteration_bounds = array<i64: 2, 1>, scalar_prefetch = 0 : i64, scratch_operands = 0 : i64, tpu.core_type = #tpu.core_type<tc>, window_params = [{transform_indices = @transform_0, window_bounds = array<i64: 1, 4, 256>}, {transform_indices = @transform_1, window_bounds = array<i64: 1, 1, 256>}, {pipeline_mode = #tpu.pipeline_mode<synchronous>, transform_indices = @transform_2, window_bounds = array<i64: 1, 4, 1>}, {transform_indices = @transform_3, window_bounds = array<i64: 1, 1, 256>}]} {
    %c0_i32 = arith.constant 0 : i32
    %0 = arith.cmpi eq, %arg1, %c0_i32 : i32
    %1 = arith.extui %0 : i1 to i32
    %c0_i32_0 = arith.constant 0 : i32
    %2 = arith.cmpi ne, %1, %c0_i32_0 : i32
    scf.if %2 {
      %cst_22 = arith.constant 0.000000e+00 : f32
      %40 = vector.broadcast %cst_22 : f32 to vector<1x1x256xf32>
      %c0_23 = arith.constant 0 : index
      %c0_24 = arith.constant 0 : index
      %c0_25 = arith.constant 0 : index
      %41 = vector.load %arg5[%c0_23, %c0_24, %c0_25] : memref<1x1x256xf32, #tpu.memory_space<vmem>>, vector<1x1x256xf32>
      tpu.vector_store %arg5[%c0_23, %c0_24, %c0_25], %40 {strides = array<i32>} : memref<1x1x256xf32, #tpu.memory_space<vmem>>, vector<1x1x256xf32>,
    } else {
    }
    %c0 = arith.constant 0 : index
    %c0_1 = arith.constant 0 : index
    %c0_2 = arith.constant 0 : index
    %3 = vector.load %arg2[%c0, %c0_1, %c0_2] : memref<1x4x256xf32, #tpu.memory_space<vmem>>, vector<1x4x256xf32>
    %c0_3 = arith.constant 0 : index
    %c0_4 = arith.constant 0 : index
    %c0_5 = arith.constant 0 : index
    %4 = vector.load %arg3[%c0_3, %c0_4, %c0_5] : memref<1x1x256xi32, #tpu.memory_space<vmem>>, vector<1x1x256xi32>
    %c0_6 = arith.constant 0 : index
    %c0_7 = arith.constant 0 : index
    %c0_8 = arith.constant 0 : index
    %5 = vector.load %arg4[%c0_6, %c0_7, %c0_8] : memref<1x4x1xf32, #tpu.memory_space<vmem>>, vector<1x4x1xf32>
    %cst = arith.constant dense<0xFF800000> : vector<1x256xf32>
    %6 = vector.multi_reduction <maximumf>, %3, %cst [1] : vector<1x4x256xf32> to vector<1x256xf32>
    %7 = vector.shape_cast %6 : vector<1x256xf32> to vector<1x1x256xf32>
    %8 = vector.broadcast %7 : vector<1x1x256xf32> to vector<1x4x256xf32>
    %9 = arith.subf %3, %8 : vector<1x4x256xf32>
    %10 = math.exp %9 : vector<1x4x256xf32>
    %cst_9 = arith.constant dense<0.000000e+00> : vector<1x256xf32>
    %11 = vector.multi_reduction <add>, %10, %cst_9 [1] : vector<1x4x256xf32> to vector<1x256xf32>
    %12 = vector.shape_cast %11 : vector<1x256xf32> to vector<1x1x256xf32>
    %13 = math.log %12 : vector<1x1x256xf32>
    %14 = vector.broadcast %13 : vector<1x1x256xf32> to vector<1x4x256xf32>
    %15 = arith.subf %9, %14 : vector<1x4x256xf32>
    %16 = tpu.iota {dimensions = array<i32: 1>} : vector<1x4x256xi32>
    %17 = vector.broadcast %4 : vector<1x1x256xi32> to vector<1x4x256xi32>
    %18 = arith.cmpi eq, %16, %17 : vector<1x4x256xi32>
    %cst_10 = arith.constant 0.000000e+00 : f32
    %19 = vector.broadcast %cst_10 : f32 to vector<1x4x256xf32>
    %20 = arith.select %18, %15, %19 : vector<1x4x256xi1>, vector<1x4x256xf32>
    %cst_11 = arith.constant dense<0.000000e+00> : vector<1x256xf32>
    %21 = vector.multi_reduction <add>, %20, %cst_11 [1] : vector<1x4x256xf32> to vector<1x256xf32>
    %22 = vector.shape_cast %21 : vector<1x256xf32> to vector<1x1x256xf32>
    %23 = math.exp %22 : vector<1x1x256xf32>
    %cst_12 = arith.constant 0.000000e+00 : f32
    %24 = vector.shape_cast %5 : vector<1x4x1xf32> to vector<1x4x1xf32>
    %25 = vector.broadcast %24 : vector<1x4x1xf32> to vector<1x4x256xf32>
    %26 = vector.broadcast %cst_12 : f32 to vector<1x4x256xf32>
    %27 = arith.select %18, %25, %26 : vector<1x4x256xi1>, vector<1x4x256xf32>
    %cst_13 = arith.constant dense<0.000000e+00> : vector<1x256xf32>
    %28 = vector.multi_reduction <add>, %27, %cst_13 [1] : vector<1x4x256xf32> to vector<1x256xf32>
    %29 = vector.shape_cast %28 : vector<1x256xf32> to vector<1x1x256xf32>
    %cst_14 = arith.constant 1.000000e+00 : f32
    %30 = vector.broadcast %cst_14 : f32 to vector<1x1x256xf32>
    %31 = arith.subf %30, %23 : vector<1x1x256xf32>
    %32 = arith.mulf %31, %31 : vector<1x1x256xf32>
    %c0_15 = arith.constant 0 : index
    %c0_16 = arith.constant 0 : index
    %c0_17 = arith.constant 0 : index
    %33 = vector.load %arg5[%c0_15, %c0_16, %c0_17] : memref<1x1x256xf32, #tpu.memory_space<vmem>>, vector<1x1x256xf32>
    %34 = arith.mulf %22, %29 : vector<1x1x256xf32>
    %35 = arith.mulf %32, %34 : vector<1x1x256xf32>
    %cst_18 = arith.constant 0.000000e+00 : f32
    %36 = vector.broadcast %cst_18 : f32 to vector<1x1x256xf32>
    %37 = arith.subf %36, %35 : vector<1x1x256xf32>
    %38 = arith.addf %33, %37 : vector<1x1x256xf32>
    %c0_19 = arith.constant 0 : index
    %c0_20 = arith.constant 0 : index
    %c0_21 = arith.constant 0 : index
    %39 = vector.load %arg5[%c0_19, %c0_20, %c0_21] : memref<1x1x256xf32, #tpu.memory_space<vmem>>, vector<1x1x256xf32>
    tpu.vector_store %arg5[%c0_19, %c0_20, %c0_21], %38 {strides = array<i32>} : memref<1x1x256xf32, #tpu.memory_space<vmem>>, vector<1x1x256xf32>,
    return
  }
  func.func @transform_0(%arg0: i32, %arg1: i32) -> (i32, i32, i32) {
    %c0_i32 = arith.constant 0 : i32
    %c0_i32_0 = arith.constant 0 : i32
    return %arg0, %c0_i32, %arg1 : i32, i32, i32
  }
  func.func @transform_1(%arg0: i32, %arg1: i32) -> (i32, i32, i32) {
    %c0_i32 = arith.constant 0 : i32
    %c0_i32_0 = arith.constant 0 : i32
    return %arg0, %c0_i32, %arg1 : i32, i32, i32
  }
  func.func @transform_2(%arg0: i32, %arg1: i32) -> (i32, i32, i32) {
    %c0_i32 = arith.constant 0 : i32
    %c0_i32_0 = arith.constant 0 : i32
    %c0_i32_1 = arith.constant 0 : i32
    %c0_i32_2 = arith.constant 0 : i32
    return %c0_i32, %c0_i32_0, %c0_i32_1 : i32, i32, i32
  }
  func.func @transform_3(%arg0: i32, %arg1: i32) -> (i32, i32, i32) {
    %c0_i32 = arith.constant 0 : i32
    %c0_i32_0 = arith.constant 0 : i32
    %c0_i32_1 = arith.constant 0 : i32
    return %arg0, %c0_i32, %c0_i32_0 : i32, i32, i32
  }
}

</mosaic_0001>

<llo_original>
// kernel: tpu_custom_call.1
$region0: #{tpu_custom_call.1}
  #allocation0 [shape = 'u32[]', space=smem, size = 0x4, offset = 0x4, fixed_abs, tag = 'smem constant byte address 0x4 - core index']
  #allocation1 [shape = 'u32[144,128]{1,0:T(1,128)}', space=vmem, size = 0x12000, scoped, tag = 'internal scratch']
  %s0 = inlined_call_operand.hbm [shape: f32[2,4,256], index: 0, kind: input, shape index: {}]
  %s1 = inlined_call_operand.vmem [shape: s32[2,1,256], index: 1, kind: input, shape index: {}]
  %s2 = inlined_call_operand.vmem [shape: f32[1,4,1], index: 2, kind: input, shape index: {}]
  %s3 = inlined_call_operand.hbm [shape: f32[2,1,256], index: 3, kind: output, shape index: {}]
  %s4 = sld [smem:[#allocation0]]
  $region53: #{tpu_custom_call.1} parent=0
    _
  %s6 = ssub.s32 1, %s4
  %s7 = scalar_select 0, %s6, %s4
  $region1: #{tpu_custom_call.1} parent=0
    #allocation2 [shape = 'u8[8192]{0}', space=vmem, size = 0x2000, scoped, tag = 'input window, operand 0']
    #allocation3 [shape = 's32[2]{0}', space=sflag, size = 0x8, scoped, tag = 'scoped memory for tpu_custom_call.1']
    #allocation4 [shape = 's32[2]{0}', space=sflag, size = 0x8, scoped, tag = 'scoped memory for tpu_custom_call.1']
    #allocation5 [shape = 'u8[2048]{0}', space=vmem, size = 0x800, scoped, tag = 'output window, operand 0']
    %8 = vsyncpa [#allocation3], 0
    %s9 = scalar_lea.sflag [#allocation3], 1
    %10 = vsyncpa %s9, 0
    %11 = vsyncpa [#allocation4], 0
    %s12 = scalar_lea.sflag [#allocation4], 1
    %13 = vsyncpa %s12, 0
    loop: start=0, step=1, limit=4
    $region2: #{tpu_custom_call.1} parent=1 // loop_pre_header
      _
    $region3: #{tpu_custom_call.1} parent=1 // loop_header
      %s15 = sphi 0, %s19
      %p16 = scmp.ge.s32.totalorder %s15, 4
      %s22 = sphi 0, %s34
      %s23 = sphi 0, %s30
      %s24 = sphi 0, %s22
      %s25 = sphi 0, %s23
      %s26 = sphi 0, %s24
      %s27 = sphi 0, %s25
      %s39 = sphi 0, %s41
      %s42 = sphi 0, %s39
      %s43 = sphi 0, %s42
      %s59 = sphi 0, %s43
      %s67 = sphi 0, %s69
      %s70 = sphi 0, %s67
      %s71 = sphi 0, %s70
      %s87 = sphi 0, %s71
      %s91 = sphi 0, %s91
      %s93 = sphi 0, %s91
      %s94 = sphi 0, %s93
      %s108 = sphi 0, %s94
      %s114 = sphi 0, %s116
      %s117 = sphi 0, %s114
      %s118 = sphi 0, %s117
      %s134 = sphi 0, %s118
    $region4: #{tpu_custom_call.1} parent=1 // loop_header_branch
      %18 = sbr.rel (%p16) target = $region8
    $region5: #{tpu_custom_call.1} parent=1 // loop_body
      %s20 = ssub.s32 %s15, 1
      %s21 = ssub.s32 %s15, 2
      %s28 = sadd.s32 1, %s23
      %p29 = scmp.ge.s32.totalorder %s28, 1
      %s30 = scalar_select %p29, 0, %s28
      %s31 = sadd.s32 1, %s22
      %s32 = scalar_select %p29, %s31, %s22
      %p33 = scmp.ge.s32.totalorder %s32, 2
      %s34 = scalar_select %p33, 0, %s32
      %s35 = ssub.s32 %s22, %s34
      %s36 = ssub.s32 %s23, %s30
      %s37 = sor.u32 %s35, %s36
      %p38 = scmp.eq.s32.totalorder %s37, 0
      %s40 = sadd.s32 %s39, 1
      %s41 = scalar_select %p38, %s39, %s40
      %p44 = pneg %p38
      %p45 = scmp.eq.s32.totalorder %s15, 1
      %p46 = por %p44, %p45
      %p47 = scmp.ne.s32.totalorder %s39, %s42
      %p48 = scmp.eq.s32.totalorder %s15, 0
      %p49 = por %p47, %p48
      %p50 = scmp.ne.s32.totalorder %s39, %s42
      %p51 = scmp.eq.s32.totalorder %s20, 1
      %p52 = por %p50, %p51
      %p53 = scmp.ne.s32.totalorder %s42, %s43
      %p54 = scmp.eq.s32.totalorder %s20, 0
      %p55 = por %p53, %p54
      %p56 = scmp.ne.s32.totalorder %s42, %s43
      %p57 = scmp.eq.s32.totalorder %s21, 1
      %p58 = por %p56, %p57
      %p60 = scmp.ne.s32.totalorder %s43, %s59
      %p61 = scmp.eq.s32.totalorder %s21, 0
      %p62 = por %p60, %p61
      %s63 = ssub.s32 %s22, %s34
      %s64 = ssub.s32 %s23, %s30
      %s65 = sor.u32 %s63, %s64
      %p66 = scmp.eq.s32.totalorder %s65, 0
      %s68 = sadd.s32 %s67, 1
      %s69 = scalar_select %p66, %s67, %s68
      %p72 = pneg %p66
      %p73 = scmp.eq.s32.totalorder %s15, 1
      %p74 = por %p72, %p73
      %p75 = scmp.ne.s32.totalorder %s67, %s70
      %p76 = scmp.eq.s32.totalorder %s15, 0
      %p77 = por %p75, %p76
      %p78 = scmp.ne.s32.totalorder %s67, %s70
      %p79 = scmp.eq.s32.totalorder %s20, 1
      %p80 = por %p78, %p79
      %p81 = scmp.ne.s32.totalorder %s70, %s71
      %p82 = scmp.eq.s32.totalorder %s20, 0
      %p83 = por %p81, %p82
      %p84 = scmp.ne.s32.totalorder %s70, %s71
      %p85 = scmp.eq.s32.totalorder %s21, 1
      %p86 = por %p84, %p85
      %p88 = scmp.ne.s32.totalorder %s71, %s87
      %p89 = scmp.eq.s32.totalorder %s21, 0
      %p90 = por %p88, %p89
      %s92 = sadd.s32 %s91, 1
      %p95 = scmp.eq.s32.totalorder %s15, 1
      %p96 = scmp.ne.s32.totalorder %s91, %s93
      %p97 = scmp.eq.s32.totalorder %s15, 0
      %p98 = por %p96, %p97
      %p99 = scmp.ne.s32.totalorder %s91, %s93
      %p100 = scmp.eq.s32.totalorder %s20, 1
      %p101 = por %p99, %p100
      %p102 = scmp.ne.s32.totalorder %s93, %s94
      %p103 = scmp.eq.s32.totalorder %s20, 0
      %p104 = por %p102, %p103
      %p105 = scmp.ne.s32.totalorder %s93, %s94
      %p106 = scmp.eq.s32.totalorder %s21, 1
      %p107 = por %p105, %p106
      %p109 = scmp.ne.s32.totalorder %s94, %s108
      %p110 = scmp.eq.s32.totalorder %s21, 0
      %p111 = por %p109, %p110
      %s112 = ssub.s32 %s22, %s34
      %p113 = scmp.eq.s32.totalorder %s112, 0
      %s115 = sadd.s32 %s114, 1
      %s116 = scalar_select %p113, %s114, %s115
      %p119 = pneg %p113
      %p120 = scmp.eq.s32.totalorder %s15, 1
      %p121 = por %p119, %p120
      %p122 = scmp.ne.s32.totalorder %s114, %s117
      %p123 = scmp.eq.s32.totalorder %s15, 0
      %p124 = por %p122, %p123
      %p125 = scmp.ne.s32.totalorder %s114, %s117
      %p126 = scmp.eq.s32.totalorder %s20, 1
      %p127 = por %p125, %p126
      %p128 = scmp.ne.s32.totalorder %s117, %s118
      %p129 = scmp.eq.s32.totalorder %s20, 0
      %p130 = por %p128, %p129
      %p131 = scmp.ne.s32.totalorder %s117, %s118
      %p132 = scmp.eq.s32.totalorder %s21, 1
      %p133 = por %p131, %p132
      %p135 = scmp.ne.s32.totalorder %s118, %s134
      %p136 = scmp.eq.s32.totalorder %s21, 0
      %p137 = por %p135, %p136
      %p138 = scmp.le.s32.totalorder 1, %s15
      %p139 = scmp.lt.s32.totalorder %s15, 3
      %p140 = pnand %p138, %p139
      %p141 = pneg %p140
      // Predicated region
      $region9: #{tpu_custom_call.1} parent=5 // pred_check
        _
      $region10: #{tpu_custom_call.1} parent=5 // pred_check_branch
        %143 = sbr.rel (%p140) target = $region12
      $region11: #{tpu_custom_call.1} parent=5 // pred_region
        %s144 = ssub.s32 %s15, 1
        // Predicated region
        $region13: #{tpu_custom_call.1} parent=11 // pred_check
          %p145 = pneg %p104
        $region14: #{tpu_custom_call.1} parent=11 // pred_check_branch
          %147 = sbr.rel (%p145) target = $region16
        $region15: #{tpu_custom_call.1} parent=11 // pred_region
          _
        $region16: #{tpu_custom_call.1} parent=11 // pred_fallthru
          _
      $region12: #{tpu_custom_call.1} parent=5 // pred_fallthru
        _
      %p148 = scmp.lt.s32.totalorder %s15, 2
      // Predicated region
      $region17: #{tpu_custom_call.1} parent=5 // pred_check
        %p149 = pneg %p148
      $region18: #{tpu_custom_call.1} parent=5 // pred_check_branch
        %151 = sbr.rel (%p149) target = $region20
      $region19: #{tpu_custom_call.1} parent=5 // pred_region
        // Predicated region
        $region21: #{tpu_custom_call.1} parent=19 // pred_check
          %p152 = pneg %p49
        $region22: #{tpu_custom_call.1} parent=19 // pred_check_branch
          %154 = sbr.rel (%p152) target = $region24
        $region23: #{tpu_custom_call.1} parent=19 // pred_region
          %s155 = sand.u32 %s39, 1
          %s156 = scalar_lea.sflag [#allocation3], %s155
          %s157 = sand.u32 %s39, 1
          %s158 = smul.addr %s157, 8
          %s159 = scalar_lea.vmem [#allocation2], %s158
          %s160 = smul.u32 2, %s23
          %s162 = ssub.s32 128, 128
          %163 = vsyncadd %s156, %s162
          %s164 = smul.addr %s22, 2
          %s165 = sadd.s32 %s160, %s164
          %s166 = smul.addr %s165, 64
          %s167 = scalar_lea.hbm %s0, %s166
          %s169 = sshll.u32 %s159, 4
          %s170 = int_to_ptr.vmem [resolvable:$true] %s169
          %172 = dma.hbm_to_vmem [thread:$0]  %s167, 128, %s170, %s156
        $region24: #{tpu_custom_call.1} parent=19 // pred_fallthru
          _
        // Predicated region
        $region25: #{tpu_custom_call.1} parent=19 // pred_check
          %p173 = pneg %p77
        $region26: #{tpu_custom_call.1} parent=19 // pred_check_branch
          %175 = sbr.rel (%p173) target = $region28
        $region27: #{tpu_custom_call.1} parent=19 // pred_region
          %s176 = smul.u32 2, %s23
          %p177 = scmp.lt.s32.totalorder %s22, 1
          %s178 = scalar_select %p177, %s22, 1
          %p179 = scmp.lt.s32.totalorder %s176, 1
          %s180 = scalar_select %p179, %s176, 1
          %s181 = smul.addr %s178, 2
          %s182 = sadd.s32 %s180, %s181
          %s183 = scalar_lea.vmem %s1, %s182
          %s184 = smul.u32 2, %s23
        $region28: #{tpu_custom_call.1} parent=19 // pred_fallthru
          _
      $region20: #{tpu_custom_call.1} parent=5 // pred_fallthru
        _
      %p185 = scmp.le.s32.totalorder 1, %s15
      %p186 = scmp.lt.s32.totalorder %s15, 3
      %p187 = pnand %p185, %p186
      %p188 = pneg %p187
      // Predicated region
      $region29: #{tpu_custom_call.1} parent=5 // pred_check
        _
      $region30: #{tpu_custom_call.1} parent=5 // pred_check_branch
        %190 = sbr.rel (%p187) target = $region32
      $region31: #{tpu_custom_call.1} parent=5 // pred_region
        %s191 = ssub.s32 %s15, 1
        %s192 = sand.u32 %s42, 1
        %s193 = scalar_lea.sflag [#allocation3], %s192
        %s194 = sand.u32 %s42, 1
        %s195 = smul.addr %s194, 8
        %s196 = scalar_lea.vmem [#allocation2], %s195
        // Predicated region
        $region33: #{tpu_custom_call.1} parent=31 // pred_check
          %p197 = pneg %p55
        $region34: #{tpu_custom_call.1} parent=31 // pred_check_branch
          %199 = sbr.rel (%p197) target = $region36
        $region35: #{tpu_custom_call.1} parent=31 // pred_region
          %200 = dma.done %s193, 128
        $region36: #{tpu_custom_call.1} parent=31 // pred_fallthru
          _
        %s201 = sand.u32 %s42, 1
        %s202 = scalar_lea.sflag [#allocation3], %s201
        %s203 = sand.u32 %s42, 1
        %s204 = smul.addr %s203, 8
        %s205 = scalar_lea.vmem [#allocation2], %s204
        %p206 = pneg %p55
        %p207 = pneg %p52
        %s208 = smul.u32 2, %s25
        %p209 = scmp.lt.s32.totalorder %s24, 1
        %s210 = scalar_select %p209, %s24, 1
        %p211 = scmp.lt.s32.totalorder %s208, 1
        %s212 = scalar_select %p211, %s208, 1
        %s213 = smul.addr %s210, 2
        %s214 = sadd.s32 %s212, %s213
        %s215 = scalar_lea.vmem %s1, %s214
        %p216 = pneg %p83
        %p217 = pneg %p80
        %p218 = pneg %p104
        %p219 = pneg %p101
        %p220 = pneg %p130
        %p221 = pneg %p127
        %s222 = sand.u32 %s117, 1
        %s223 = scalar_lea.sflag [#allocation4], %s222
        %s224 = sand.u32 %s117, 1
        %s225 = smul.addr %s224, 2
        %s226 = scalar_lea.vmem [#allocation5], %s225
        %s227 = smul.u32 2, %s25
        %s228 = smul.u32 2, %s25
        %p229 = scmp.lt.s32.totalorder %s24, 1
        %s230 = scalar_select %p229, %s24, 1
        %p231 = scmp.lt.s32.totalorder %s228, 1
        %s232 = scalar_select %p231, %s228, 1
        %s233 = smul.addr %s230, 2
        %s234 = sadd.s32 %s232, %s233
        %s235 = scalar_lea.vmem %s1, %s234
        %s236 = smul.u32 2, %s25
        %p237 = scmp.eq.s32.totalorder %s25, 0
        // Predicated region
        $region37: #{tpu_custom_call.1} parent=31 // pred_check
          %p238 = pneg %p237
        $region38: #{tpu_custom_call.1} parent=31 // pred_check_branch
          %240 = sbr.rel (%p238) target = $region40
        $region39: #{tpu_custom_call.1} parent=31 // pred_region
          %v241 = vlaneseq
          %vm242 = vcmp.ge.s32.totalorder %v241, 0
          %vm243 = vcmp.lt.s32.totalorder %v241, 256
          %vm244 = vmand %vm242, %vm243
          %245 = vst.msk [vmem:[%s226] sm:$0x3] %vm244, 0.0
        $region40: #{tpu_custom_call.1} parent=31 // pred_fallthru
          _
        %v246 = vld [vmem:[%s196] sm:$0xff]
        %v247 = vld [vmem:[%s235] sm:$0x3]
        %v248 = vld [vmem:[%s2] sm:$0xf]
        %v250 = vcombine.high %v246, %v246
        %vm252 = vcmask 1043456
        %v253 = vsel %vm252, %v246, -inf
        %v254 = vrot.slane %v253, 4
        %v255 = vmax.f32 %v253, %v254
        %v256 = vrot.slane %v255, 2
        %v257 = vmax.f32 %v255, %v256
        %v258 = vrot.slane %v257, 1
        %v259 = vmax.f32 %v257, %v258
        %v260 = vsel %vm252, %v250, -inf
        %v261 = vrot.slane %v260, 4
        %v262 = vmax.f32 %v260, %v261
        %v263 = vrot.slane %v262, 2
        %v264 = vmax.f32 %v262, %v263
        %v265 = vrot.slane %v264, 1
        %v266 = vmax.f32 %v264, %v265
        %v269 = vcombine.low %v259, %v266
        %v271 = vsub.f32 %v246, %v269
        %v272 = vmul.f32 %v271, 1.442695
        %v273 = vpow.pop %v272
        %v275 = vcombine.high %v273, %v273
        %v277 = vsel %vm252, %v273, 0.0
        %v278 = vrot.slane %v277, 4
        %v279 = vadd.f32 %v277, %v278
        %v280 = vrot.slane %v279, 2
        %v281 = vadd.f32 %v279, %v280
        %v282 = vrot.slane %v281, 1
        %v283 = vadd.f32 %v281, %v282
        %v284 = vsel %vm252, %v275, 0.0
        %v285 = vrot.slane %v284, 4
        %v286 = vadd.f32 %v284, %v285
        %v287 = vrot.slane %v286, 2
        %v288 = vadd.f32 %v286, %v287
        %v289 = vrot.slane %v288, 1
        %v290 = vadd.f32 %v288, %v289
        %v291 = vlog2.pop %v283
        %v292 = vmul.f32 %v291, 0.6931472
        %v293 = vlog2.pop %v290
        %v294 = vmul.f32 %v293, 0.6931472
        %v297 = vcombine.low %v292, %v294
        %v299 = vsub.f32 %v271, %v297
        %v300 = vlaneseq
        %v301 = vshrl.u32 %v300, 7
        %v302 = vlaneseq
        %v303 = vshrl.u32 %v302, 7
        %v304 = vsub.s32 0, %v303
        %v305 = vrot.slane %v247, %v304
        %v306 = vlaneseq
        %v307 = vshrl.u32 %v306, 7
        %v308 = vsub.s32 1, %v307
        %v309 = vrot.slane %v247, %v308
        %vm310 = vcmp.eq.s32.totalorder %v301, %v305
        %vm311 = vcmp.eq.s32.totalorder %v301, %v309
        %v313 = vcombine.high %v299, %v299
        %v315 = vsel %vm310, %v299, 0.0
        %v316 = vsel %vm311, %v313, 0.0
        %v317 = vsel %vm252, %v315, 0.0
        %v318 = vrot.slane %v317, 4
        %v319 = vadd.f32 %v317, %v318
        %v320 = vrot.slane %v319, 2
        %v321 = vadd.f32 %v319, %v320
        %v322 = vrot.slane %v321, 1
        %v323 = vadd.f32 %v321, %v322
        %v324 = vsel %vm252, %v316, 0.0
        %v325 = vrot.slane %v324, 4
        %v326 = vadd.f32 %v324, %v325
        %v327 = vrot.slane %v326, 2
        %v328 = vadd.f32 %v326, %v327
        %v329 = vrot.slane %v328, 1
        %v330 = vadd.f32 %v328, %v329
        %v331 = vmul.f32 %v323, 1.442695
        %v332 = vpow.pop %v331
        %v333 = vmul.f32 %v330, 1.442695
        %v334 = vpow.pop %v333
        %336 = vset.pattern.permute.xlu0 0
        %337 = vperm.xlu0 %336, %v248
        %v338 = vpop.permute.xlu0 %337
        %v340 = vsel %vm310, %v338, 0.0
        %v341 = vsel %vm311, %v338, 0.0
        %v342 = vsel %vm252, %v340, 0.0
        %v343 = vrot.slane %v342, 4
        %v344 = vadd.f32 %v342, %v343
        %v345 = vrot.slane %v344, 2
        %v346 = vadd.f32 %v344, %v345
        %v347 = vrot.slane %v346, 1
        %v348 = vadd.f32 %v346, %v347
        %v349 = vsel %vm252, %v341, 0.0
        %v350 = vrot.slane %v349, 4
        %v351 = vadd.f32 %v349, %v350
        %v352 = vrot.slane %v351, 2
        %v353 = vadd.f32 %v351, %v352
        %v354 = vrot.slane %v353, 1
        %v355 = vadd.f32 %v353, %v354
        %v356 = vsub.f32 1.0, %v332
        %v357 = vsub.f32 1.0, %v334
        %v358 = vmul.f32 %v356, %v356
        %v359 = vmul.f32 %v357, %v357
        %v360 = vld [vmem:[%s226] sm:$0x3]
        %v361 = vmul.f32 %v323, %v348
        %v362 = vmul.f32 %v330, %v355
        %v363 = vmul.f32 %v358, %v361
        %v364 = vmul.f32 %v359, %v362
        %v365 = vsub.f32 0.0, %v363
        %v366 = vsub.f32 0.0, %v364
        %v369 = vcombine.low %v365, %v366
        %v371 = vunpack.c.l.s4 1966171168
        %v372 = vunpack.c.0.s8 %v371
        %v373 = vlaneseq
        %v374 = vshrl.u32 %v373, 7
        %v375 = vsub.s32 %v372, %v374
        %v376 = vrot.slane %v369, %v375
        %v378 = vunpack.c.l.s4 1966171168
        %v379 = vunpack.c.0.s8 %v378
        %v380 = vlaneseq
        %v381 = vshrl.u32 %v380, 7
        %v382 = vsub.s32 %v379, %v381
        %v383 = vrot.slane %v376, %v382
        %v385 = vadd.f32 %v360, %v383
        %v386 = vlaneseq
        %vm387 = vcmp.ge.s32.totalorder %v386, 0
        %vm388 = vcmp.lt.s32.totalorder %v386, 256
        %vm389 = vmand %vm387, %vm388
        %390 = vst.msk [vmem:[%s226] sm:$0x3] %vm389, %v385
        %s391 = sand.u32 %s117, 1
        %s392 = scalar_lea.sflag [#allocation4], %s391
        %s393 = sand.u32 %s117, 1
        %s394 = smul.addr %s393, 2
        %s395 = scalar_lea.vmem [#allocation5], %s394
        // Predicated region
        $region41: #{tpu_custom_call.1} parent=31 // pred_check
          %p396 = pneg %p127
        $region42: #{tpu_custom_call.1} parent=31 // pred_check_branch
          %398 = sbr.rel (%p396) target = $region44
        $region43: #{tpu_custom_call.1} parent=31 // pred_region
          %s400 = ssub.s32 32, 32
          %401 = vsyncadd %s392, %s400
          %s402 = smul.addr %s24, 2
          %s403 = smul.addr %s402, 16
          %s404 = scalar_lea.hbm %s3, %s403
          %s406 = sshll.u32 %s395, 4
          %s407 = int_to_ptr.vmem [resolvable:$true] %s406
          %409 = dma.vmem_to_hbm [thread:$0]  %s407, 32, %s404, %s392
        $region44: #{tpu_custom_call.1} parent=31 // pred_fallthru
          _
      $region32: #{tpu_custom_call.1} parent=5 // pred_fallthru
        _
      %p410 = scmp.le.s32.totalorder 2, %s15
      // Predicated region
      $region45: #{tpu_custom_call.1} parent=5 // pred_check
        %p411 = pneg %p410
      $region46: #{tpu_custom_call.1} parent=5 // pred_check_branch
        %413 = sbr.rel (%p411) target = $region48
      $region47: #{tpu_custom_call.1} parent=5 // pred_region
        %s414 = ssub.s32 %s15, 2
        // Predicated region
        $region49: #{tpu_custom_call.1} parent=47 // pred_check
          %p415 = pneg %p133
        $region50: #{tpu_custom_call.1} parent=47 // pred_check_branch
          %417 = sbr.rel (%p415) target = $region52
        $region51: #{tpu_custom_call.1} parent=47 // pred_region
          %s418 = sand.u32 %s118, 1
          %s419 = scalar_lea.sflag [#allocation4], %s418
          %s420 = sand.u32 %s118, 1
          %s421 = smul.addr %s420, 2
          %s422 = scalar_lea.vmem [#allocation5], %s421
          %423 = dma.done %s419, 32
        $region52: #{tpu_custom_call.1} parent=47 // pred_fallthru
          _
      $region48: #{tpu_custom_call.1} parent=5 // pred_fallthru
        _
    $region6: #{tpu_custom_call.1} parent=1 // loop_footer
      %s19 = sadd.s32 1, %s15
    $region7: #{tpu_custom_call.1} parent=1 // loop_footer_branch
      %14 = sbr.rel target = $region3
    $region8: #{tpu_custom_call.1} parent=1 // loop_exit
      _
    %424 = vsyncpa [#allocation3], 1
    %s425 = scalar_lea.sflag [#allocation3], 1
    %426 = vsyncpa %s425, 1
    %427 = vsyncpa [#allocation4], 1
    %s428 = scalar_lea.sflag [#allocation4], 1
    %429 = vsyncpa %s428, 1

</llo_original>
